<compile_context>
chip_gen: v6e
topology: v6e:2x2x1
jax: 0.10.0
libtpu: 0.0.40
codegen_flags: <defaults>
</compile_context>

<pallas_src>
import functools

import jax
import jax.numpy as jnp
from jax.experimental import pallas as pl
from jax.experimental.pallas import tpu as pltpu


def _round_up(x, m):
    return (x + m - 1) // m * m


def _cdiv(a, b):
    return (a + b - 1) // b


# ----------------- Stage 2 kernel: luts tile = weights @ W2 tile ----------- #

def _luts_kernel(w_ref, w2_ref, luts_ref):
    # LHS is tiny and VMEM-resident (constant block index); W2 tile streams in.
    luts_ref[...] = jnp.dot(
        w_ref[...], w2_ref[...], preferred_element_type=jnp.float32
    ).astype(luts_ref.dtype)


# ----------------------------- Parameter prep ------------------------------ #

def prepare_lut_bank(w2_t, *, target_tile_bytes=2 << 20, max_tiles=16,
                     lut_bank_dtype=None):
    """One-time (outside-jit) prep of the basis bank: dtype cast + pad + tiling plan.

    Args:
      w2_t: (n_ranks, n_colors * n_vertices**n_colors)  basis_luts_bank.weight.T
      target_tile_bytes: desired W2-tile footprint (amortizes per-step overhead).
      max_tiles: cap on the grid length.
      lut_bank_dtype: optional narrower dtype (e.g. jnp.bfloat16) to halve the
        dominant HBM read; None keeps exact f32 semantics.

    Returns:
      (w2_bank, tn): column-padded bank of shape (n_ranks, n_tiles * tn) and the
      static tile width.  Call once at parameter-load time and reuse the result.
    """
    n_ranks, lut_dim = w2_t.shape
    if lut_bank_dtype is not None:
        w2_t = w2_t.astype(lut_bank_dtype)
    bpe = jnp.dtype(w2_t.dtype).itemsize

    n_lane_blocks = _cdiv(lut_dim, 128)                 # 128-lane column groups
    bank_bytes = n_ranks * n_lane_blocks * 128 * bpe
    n_tiles = _cdiv(bank_bytes, target_tile_bytes)      # ~target-sized W2 tiles
    n_tiles = min(max(n_tiles, 2), max_tiles)           # >=2 so both v7x TCs work
    if n_tiles % 2:
        n_tiles += 1                                    # even split across 2 TCs
    n_tiles = max(min(n_tiles, n_lane_blocks), 1)       # keep tn >= 128

    tn = _cdiv(n_lane_blocks, n_tiles) * 128            # lane-dense tile width
    lut_dim_pad = n_tiles * tn                          # <0.5% pad waste
    if lut_dim_pad != lut_dim:
        w2_t = jnp.pad(w2_t, ((0, 0), (0, lut_dim_pad - lut_dim)))
    return w2_t, tn


# --------------------------------- Forward --------------------------------- #

def lut3d_generator_forward(x, w1_t, b1, w2_bank, *, n_colors, n_vertices, tn):
    """Fused LUT3DGenerator forward.

    Args:
      x:       (B, n_feats) float32.
      w1_t:    (n_feats, n_ranks)           weights_generator.weight.T
      b1:      (n_ranks,)                   weights_generator.bias
      w2_bank: (n_ranks, lut_dim_pad)       column-padded basis bank from
               `prepare_lut_bank` (lut_dim_pad = n_tiles * tn).
      tn:      static tile width returned by `prepare_lut_bank`.
    Returns:
      weights: (B, n_ranks) float32
      luts:    (B, n_colors, n_vertices, ..., n_vertices) float32
    """
    B, _ = x.shape
    n_ranks = w1_t.shape[1]
    lut_dim = n_colors * n_vertices ** n_colors
    lut_dim_pad = w2_bank.shape[1]
    assert lut_dim_pad % tn == 0 and lut_dim_pad >= lut_dim, \
        "w2_bank must come from prepare_lut_bank with the same tn"
    n_tiles = lut_dim_pad // tn

    # Stage 1: tiny (B,F)@(F,R)+b GEMM — plain XLA, fused into the jit graph
    # (no extra kernel dispatch; the B*R intermediate is a few hundred bytes).
    weights = jnp.dot(x, w1_t, preferred_element_type=jnp.float32) + b1
    lhs = weights.astype(w2_bank.dtype)      # single cast (no-op for f32 bank)

    # VMEM budget: double-buffered W2 tile + double-buffered output tile +
    # resident LHS block (sublane-padded), 1.5x headroom, capped at 48 MiB
    # (leave headroom below v7x's 64 MiB physical VMEM).
    bpe_w2 = jnp.dtype(w2_bank.dtype).itemsize
    b_pad = _round_up(B, 8)
    r_pad = _round_up(n_ranks, 8)
    tile_bytes = (2 * r_pad * tn * bpe_w2
                  + 2 * b_pad * tn * 4
                  + 2 * b_pad * r_pad * bpe_w2)
    vmem_limit = int(min(48 * 1024 * 1024,
                         max(4 * 1024 * 1024, (3 * tile_bytes) // 2)))

    cost = pl.CostEstimate(
        flops=2 * B * n_ranks * lut_dim_pad,
        transcendentals=0,
        bytes_accessed=(B * n_ranks * bpe_w2
                        + n_ranks * lut_dim_pad * bpe_w2
                        + B * lut_dim_pad * 4),
    )

    luts_flat = pl.pallas_call(
        _luts_kernel,
        out_shape=jax.ShapeDtypeStruct((B, lut_dim_pad), jnp.float32),
        grid=(n_tiles,),
        in_specs=[
            pl.BlockSpec((B, n_ranks), lambda j: (0, 0)),   # VMEM-resident LHS
            pl.BlockSpec((n_ranks, tn), lambda j: (0, j)),  # streamed W2 tile
        ],
        out_specs=pl.BlockSpec((B, tn), lambda j: (0, j)),  # lane-dense stores
        compiler_params=pltpu.CompilerParams(
            dimension_semantics=("parallel",),
            vmem_limit_bytes=vmem_limit,
        ),
        cost_estimate=cost,
    )(lhs, w2_bank)

    if lut_dim_pad != lut_dim:
        luts_flat = luts_flat[:, :lut_dim]
    luts = luts_flat.reshape((B, n_colors) + (n_vertices,) * n_colors)
    return weights, luts


# ----------------------------- Synthetic params ---------------------------- #

def make_params(key, n_colors, n_vertices, n_feats, n_ranks):
    """Deterministic synthetic parameters with the module's shapes.

    Follows init_weights(): weights_generator.bias = ones; basis_luts_bank
    weight has the identity lattice as the first basis LUT and zeros elsewhere
    (torch meshgrid 'ij', channel flip(0), /(V-1), row-major flatten — same
    ordering as torch's .view(n_ranks, -1)); weights_generator.weight is a
    small-random stand-in for the default nn.Linear init.
    """
    (k1,) = jax.random.split(key, 1)
    w1 = jax.random.normal(k1, (n_ranks, n_feats), jnp.float32) * (1.0 / jnp.sqrt(n_feats))
    b1 = jnp.ones((n_ranks,), jnp.float32)

    coords = jnp.arange(n_vertices, dtype=jnp.float32) / (n_vertices - 1)
    grids = jnp.meshgrid(*([coords] * n_colors), indexing="ij")   # list of (V,)*C
    identity = jnp.stack(grids, axis=0)[::-1]                     # (C, V,...,V), flip(0)
    lut0 = identity.reshape(-1)                                   # (C * V^C,)
    # basis_luts_bank.weight is (out, in) = (C*V^C, n_ranks); the kernel takes
    # the transposed (in, out) layout, which is exactly this matrix:
    w2_t = jnp.zeros((n_ranks, n_colors * n_vertices ** n_colors), jnp.float32)
    w2_t = w2_t.at[0].set(lut0)
    return w1.T, b1, w2_t   # (n_feats, n_ranks), (n_ranks,), (n_ranks, C*V^C)


if __name__ == "__main__":
    # Small TPU-friendly config: n_colors=3, n_vertices=8 -> lut_dim = 3*8^3 = 1536.
    n_colors, n_vertices, n_feats, n_ranks = 3, 8, 32, 8
    batch = 2

    key = jax.random.PRNGKey(0)
    kx, kp = jax.random.split(key)
    x = jax.random.normal(kx, (batch, n_feats), jnp.float32)
    w1_t, b1, w2_t = make_params(kp, n_colors, n_vertices, n_feats, n_ranks)

    # One-time bank prep (outside the jitted forward): for lut_dim=1536 this
    # yields 2 lane-dense tiles of tn=768 columns (no padding, no post-slice).
    w2_bank, tn = prepare_lut_bank(w2_t)

    fwd = jax.jit(functools.partial(
        lut3d_generator_forward, n_colors=n_colors, n_vertices=n_vertices, tn=tn))
    weights, luts = fwd(x, w1_t, b1, w2_bank)
    weights = jax.block_until_ready(weights)
    luts = jax.block_until_ready(luts)

    # Reference check in plain JAX (same math as the nn.Linear chain).
    ref_w = x @ w1_t + b1
    ref_luts = (ref_w @ w2_t).reshape((batch, n_colors) + (n_vertices,) * n_colors)
    assert weights.shape == (batch, n_ranks)
    assert luts.shape == (batch, n_colors) + (n_vertices,) * n_colors
    assert jnp.allclose(weights, ref_w, atol=1e-5, rtol=1e-5)
    assert jnp.allclose(luts, ref_luts, atol=1e-5, rtol=1e-5)

    print("KERNEL_OK")
</pallas_src>

<mosaic_0001>
module attributes {stable_mosaic.version = 11 : i64} {
  func.func @_luts_kernel(%arg0: i32, %arg1: memref<2x8xf32, #tpu.memory_space<vmem>>, %arg2: memref<8x768xf32, #tpu.memory_space<vmem>>, %arg3: memref<2x768xf32, #tpu.memory_space<vmem>>) attributes {dimension_semantics = [#tpu.dimension_semantics<parallel>], iteration_bounds = array<i64: 2>, scalar_prefetch = 0 : i64, scratch_operands = 0 : i64, tpu.core_type = #tpu.core_type<tc>, window_params = [{pipeline_mode = #tpu.pipeline_mode<synchronous>, transform_indices = @transform_0, window_bounds = array<i64: 2, 8>}, {transform_indices = @transform_1, window_bounds = array<i64: 8, 768>}, {transform_indices = @transform_2, window_bounds = array<i64: 2, 768>}]} {
    %c0 = arith.constant 0 : index
    %c0_0 = arith.constant 0 : index
    %0 = vector.load %arg1[%c0, %c0_0] : memref<2x8xf32, #tpu.memory_space<vmem>>, vector<2x8xf32>
    %c0_1 = arith.constant 0 : index
    %c0_2 = arith.constant 0 : index
    %1 = vector.load %arg2[%c0_1, %c0_2] : memref<8x768xf32, #tpu.memory_space<vmem>>, vector<8x768xf32>
    %cst = arith.constant dense<0.000000e+00> : vector<2x768xf32>
    %2 = tpu.matmul %0, %1, %cst {dimension_numbers = #tpu.dot_dimension_numbers<[1], [0], [0], [1], [0, 0, 1, 1], [], []>} : vector<2x8xf32>, vector<8x768xf32>, vector<2x768xf32> -> vector<2x768xf32>
    %c0_3 = arith.constant 0 : index
    %c0_4 = arith.constant 0 : index
    %3 = vector.load %arg3[%c0_3, %c0_4] : memref<2x768xf32, #tpu.memory_space<vmem>>, vector<2x768xf32>
    tpu.vector_store %arg3[%c0_3, %c0_4], %2 {strides = array<i32>} : memref<2x768xf32, #tpu.memory_space<vmem>>, vector<2x768xf32>,
    return
  }
  func.func @transform_0(%arg0: i32) -> (i32, i32) {
    %c0_i32 = arith.constant 0 : i32
    %c0_i32_0 = arith.constant 0 : i32
    %c0_i32_1 = arith.constant 0 : i32
    return %c0_i32, %c0_i32_0 : i32, i32
  }
  func.func @transform_1(%arg0: i32) -> (i32, i32) {
    %c0_i32 = arith.constant 0 : i32
    %c0_i32_0 = arith.constant 0 : i32
    return %c0_i32, %arg0 : i32, i32
  }
  func.func @transform_2(%arg0: i32) -> (i32, i32) {
    %c0_i32 = arith.constant 0 : i32
    %c0_i32_0 = arith.constant 0 : i32
    return %c0_i32, %arg0 : i32, i32
  }
}

</mosaic_0001>

<llo_original>
// kernel: lut3d_generator_forward.1
$region0: #{lut3d_generator_forward.1}
  #allocation0 [shape = 'u32[]', space=smem, size = 0x4, offset = 0x4, fixed_abs, tag = 'smem constant byte address 0x4 - core index']
  #allocation1 [shape = 'u32[144,128]{1,0:T(1,128)}', space=vmem, size = 0x12000, scoped, tag = 'internal scratch']
  %s0 = inlined_call_operand.vmem [shape: f32[2,8], index: 0, kind: input, shape index: {}]
  %s1 = inlined_call_operand.hbm [shape: f32[8,1536], index: 1, kind: input, shape index: {}]
  %s2 = inlined_call_operand.vmem [shape: f32[2,1536], index: 2, kind: output, shape index: {}]
  %s3 = sld [smem:[#allocation0]]
  $region45: #{lut3d_generator_forward.1} parent=0
    _
  %s5 = ssub.s32 1, %s3
  %s6 = scalar_select 0, %s5, %s3
  $region1: #{lut3d_generator_forward.1} parent=0
    #allocation2 [shape = 'u8[49152]{0}', space=vmem, size = 0xc000, scoped, tag = 'input window, operand 1']
    #allocation3 [shape = 's32[2]{0}', space=sflag, size = 0x8, scoped, tag = 'scoped memory for lut3d_generator_forward.1']
    %7 = vsyncpa [#allocation3], 0
    %s8 = scalar_lea.sflag [#allocation3], 1
    %9 = vsyncpa %s8, 0
    loop: start=0, step=1, limit=4
    $region2: #{lut3d_generator_forward.1} parent=1 // loop_pre_header
      _
    $region3: #{lut3d_generator_forward.1} parent=1 // loop_header
      %s11 = sphi 0, %s15
      %p12 = scmp.ge.s32.totalorder %s11, 4
      %s19 = sphi 0, %s19
      %s21 = sphi 0, %s19
      %s22 = sphi 0, %s21
      %s36 = sphi 0, %s22
      %s42 = sphi 0, %s44
      %s45 = sphi 0, %s42
      %s46 = sphi 0, %s45
      %s62 = sphi 0, %s46
      %s68 = sphi 0, %s70
      %s71 = sphi 0, %s68
      %s72 = sphi 0, %s71
      %s88 = sphi 0, %s72
    $region4: #{lut3d_generator_forward.1} parent=1 // loop_header_branch
      %14 = sbr.rel (%p12) target = $region8
    $region5: #{lut3d_generator_forward.1} parent=1 // loop_body
      %s16 = ssub.s32 %s11, 1
      %s17 = ssub.s32 %s11, 2
      %s18 = sadd.s32 %s11, 1
      %s20 = sadd.s32 %s19, 1
      %p23 = scmp.eq.s32.totalorder %s11, 1
      %p24 = scmp.ne.s32.totalorder %s19, %s21
      %p25 = scmp.eq.s32.totalorder %s11, 0
      %p26 = por %p24, %p25
      %p27 = scmp.ne.s32.totalorder %s19, %s21
      %p28 = scmp.eq.s32.totalorder %s16, 1
      %p29 = por %p27, %p28
      %p30 = scmp.ne.s32.totalorder %s21, %s22
      %p31 = scmp.eq.s32.totalorder %s16, 0
      %p32 = por %p30, %p31
      %p33 = scmp.ne.s32.totalorder %s21, %s22
      %p34 = scmp.eq.s32.totalorder %s17, 1
      %p35 = por %p33, %p34
      %p37 = scmp.ne.s32.totalorder %s22, %s36
      %p38 = scmp.eq.s32.totalorder %s17, 0
      %p39 = por %p37, %p38
      %s40 = ssub.s32 %s11, %s18
      %p41 = scmp.eq.s32.totalorder %s40, 0
      %s43 = sadd.s32 %s42, 1
      %s44 = scalar_select %p41, %s42, %s43
      %p47 = pneg %p41
      %p48 = scmp.eq.s32.totalorder %s11, 1
      %p49 = por %p47, %p48
      %p50 = scmp.ne.s32.totalorder %s42, %s45
      %p51 = scmp.eq.s32.totalorder %s11, 0
      %p52 = por %p50, %p51
      %p53 = scmp.ne.s32.totalorder %s42, %s45
      %p54 = scmp.eq.s32.totalorder %s16, 1
      %p55 = por %p53, %p54
      %p56 = scmp.ne.s32.totalorder %s45, %s46
      %p57 = scmp.eq.s32.totalorder %s16, 0
      %p58 = por %p56, %p57
      %p59 = scmp.ne.s32.totalorder %s45, %s46
      %p60 = scmp.eq.s32.totalorder %s17, 1
      %p61 = por %p59, %p60
      %p63 = scmp.ne.s32.totalorder %s46, %s62
      %p64 = scmp.eq.s32.totalorder %s17, 0
      %p65 = por %p63, %p64
      %s66 = ssub.s32 %s11, %s18
      %p67 = scmp.eq.s32.totalorder %s66, 0
      %s69 = sadd.s32 %s68, 1
      %s70 = scalar_select %p67, %s68, %s69
      %p73 = pneg %p67
      %p74 = scmp.eq.s32.totalorder %s11, 1
      %p75 = por %p73, %p74
      %p76 = scmp.ne.s32.totalorder %s68, %s71
      %p77 = scmp.eq.s32.totalorder %s11, 0
      %p78 = por %p76, %p77
      %p79 = scmp.ne.s32.totalorder %s68, %s71
      %p80 = scmp.eq.s32.totalorder %s16, 1
      %p81 = por %p79, %p80
      %p82 = scmp.ne.s32.totalorder %s71, %s72
      %p83 = scmp.eq.s32.totalorder %s16, 0
      %p84 = por %p82, %p83
      %p85 = scmp.ne.s32.totalorder %s71, %s72
      %p86 = scmp.eq.s32.totalorder %s17, 1
      %p87 = por %p85, %p86
      %p89 = scmp.ne.s32.totalorder %s72, %s88
      %p90 = scmp.eq.s32.totalorder %s17, 0
      %p91 = por %p89, %p90
      %p92 = scmp.le.s32.totalorder 1, %s11
      %p93 = scmp.lt.s32.totalorder %s11, 3
      %p94 = pnand %p92, %p93
      %p95 = pneg %p94
      // Predicated region
      $region9: #{lut3d_generator_forward.1} parent=5 // pred_check
        _
      $region10: #{lut3d_generator_forward.1} parent=5 // pred_check_branch
        %97 = sbr.rel (%p94) target = $region12
      $region11: #{lut3d_generator_forward.1} parent=5 // pred_region
        %s98 = ssub.s32 %s11, 1
        // Predicated region
        $region13: #{lut3d_generator_forward.1} parent=11 // pred_check
          %p99 = pneg %p32
        $region14: #{lut3d_generator_forward.1} parent=11 // pred_check_branch
          %101 = sbr.rel (%p99) target = $region16
        $region15: #{lut3d_generator_forward.1} parent=11 // pred_region
          _
        $region16: #{lut3d_generator_forward.1} parent=11 // pred_fallthru
          _
      $region12: #{lut3d_generator_forward.1} parent=5 // pred_fallthru
        _
      %p102 = scmp.lt.s32.totalorder %s11, 2
      // Predicated region
      $region17: #{lut3d_generator_forward.1} parent=5 // pred_check
        %p103 = pneg %p102
      $region18: #{lut3d_generator_forward.1} parent=5 // pred_check_branch
        %105 = sbr.rel (%p103) target = $region20
      $region19: #{lut3d_generator_forward.1} parent=5 // pred_region
        // Predicated region
        $region21: #{lut3d_generator_forward.1} parent=19 // pred_check
          %p106 = pneg %p52
        $region22: #{lut3d_generator_forward.1} parent=19 // pred_check_branch
          %108 = sbr.rel (%p106) target = $region24
        $region23: #{lut3d_generator_forward.1} parent=19 // pred_region
          %s109 = sand.u32 %s42, 1
          %s110 = scalar_lea.sflag [#allocation3], %s109
          %s111 = sand.u32 %s42, 1
          %s112 = smul.addr %s111, 48
          %s113 = scalar_lea.vmem [#allocation2], %s112
          %s114 = smul.u32 6, %s11
          %s116 = ssub.s32 768, 768
          %117 = vsyncadd %s110, %s116
          %s118 = smul.addr %s114, 128
          %s119 = scalar_lea.hbm %s1, %s118
          %s121 = sshll.u32 %s113, 4
          %s122 = int_to_ptr.vmem [resolvable:$true] %s121
          %124 = dma.hbm_to_vmem [thread:$0]  %s119, 768, %s122, %s110
        $region24: #{lut3d_generator_forward.1} parent=19 // pred_fallthru
          _
      $region20: #{lut3d_generator_forward.1} parent=5 // pred_fallthru
        _
      %p125 = scmp.le.s32.totalorder 1, %s11
      %p126 = scmp.lt.s32.totalorder %s11, 3
      %p127 = pnand %p125, %p126
      %p128 = pneg %p127
      // Predicated region
      $region25: #{lut3d_generator_forward.1} parent=5 // pred_check
        _
      $region26: #{lut3d_generator_forward.1} parent=5 // pred_check_branch
        %130 = sbr.rel (%p127) target = $region28
      $region27: #{lut3d_generator_forward.1} parent=5 // pred_region
        %s131 = ssub.s32 %s11, 1
        %s132 = sand.u32 %s45, 1
        %s133 = scalar_lea.sflag [#allocation3], %s132
        %s134 = sand.u32 %s45, 1
        %s135 = smul.addr %s134, 48
        %s136 = scalar_lea.vmem [#allocation2], %s135
        // Predicated region
        $region29: #{lut3d_generator_forward.1} parent=27 // pred_check
          %p137 = pneg %p58
        $region30: #{lut3d_generator_forward.1} parent=27 // pred_check_branch
          %139 = sbr.rel (%p137) target = $region32
        $region31: #{lut3d_generator_forward.1} parent=27 // pred_region
          %140 = dma.done %s133, 768
        $region32: #{lut3d_generator_forward.1} parent=27 // pred_fallthru
          _
        %p141 = pneg %p32
        %p142 = pneg %p29
        %s143 = sand.u32 %s45, 1
        %s144 = scalar_lea.sflag [#allocation3], %s143
        %s145 = sand.u32 %s45, 1
        %s146 = smul.addr %s145, 48
        %s147 = scalar_lea.vmem [#allocation2], %s146
        %p148 = pneg %p58
        %p149 = pneg %p55
        %p150 = pneg %p84
        %p151 = pneg %p81
        %s152 = smul.u32 6, %s16
        %p153 = scmp.lt.s32.totalorder %s152, 11
        %s154 = scalar_select %p153, %s152, 11
        %s155 = smul.addr %s154, 2
        %s156 = scalar_lea.vmem %s2, %s155
        %s157 = smul.u32 6, %s16
        %s158 = smul.u32 6, %s16
        %p159 = scmp.lt.s32.totalorder %s158, 11
        %s160 = scalar_select %p159, %s158, 11
        %s161 = smul.addr %s160, 2
        %s162 = scalar_lea.vmem %s2, %s161
        %s163 = smul.u32 6, %s16
        %v164 = vld [vmem:[%s0] sm:$0x3]
        %v165 = vld [vmem:[%s136] sm:$0xff]
        %v166 = vld [vmem:[%s136 + $0x8] sm:$0xff]
        %v167 = vld [vmem:[%s136 + $0x10] sm:$0xff]
        %v168 = vld [vmem:[%s136 + $0x18] sm:$0xff]
        %v169 = vld [vmem:[%s136 + $0x20] sm:$0xff]
        %v170 = vld [vmem:[%s136 + $0x28] sm:$0xff]
        %vm171 = vcmask 64512
        %v173 = vsel %vm171, %v164, 0
        %175 = vmatprep.subr.mxu0 0.0
        %176 = vmatpush1.msra.mxu0 0.0
        %177 = vmatprep.subr.mxu0 0.0
        %178 = vmatpush1.msra.mxu0 0.0
        %179 = vmatprep.subr.mxu0 0.0
        %180 = vmatpush1.msra.mxu0 0.0
        %181 = vmatprep.subr.mxu0 0.0
        %182 = vmatpush1.msra.mxu0 0.0
        %183 = vmatprep.subr.mxu0 0.0
        %184 = vmatpush1.msra.mxu0 0.0
        %185 = vmatprep.subr.mxu0 0.0
        %186 = vmatpush1.msra.mxu0 0.0
        %187 = vmatprep.subr.mxu0 0.0
        %188 = vmatpush1.msra.mxu0 0.0
        %189 = vmatprep.subr.mxu0 0.0
        %190 = vmatpush1.msra.mxu0 0.0
        %191 = vmatprep.subr.mxu0 0.0
        %192 = vmatpush1.msra.mxu0 0.0
        %193 = vmatprep.subr.mxu0 0.0
        %194 = vmatpush1.msra.mxu0 0.0
        %195 = vmatprep.subr.mxu0 0.0
        %196 = vmatpush1.msra.mxu0 0.0
        %197 = vmatprep.subr.mxu0 0.0
        %198 = vmatpush1.msra.mxu0 0.0
        %199 = vmatprep.subr.mxu0 0.0
        %200 = vmatpush1.msra.mxu0 0.0
        %201 = vmatprep.subr.mxu0 0.0
        %202 = vmatpush1.msra.mxu0 0.0
        %203 = vmatprep.subr.mxu0 0.0
        %204 = vmatpush1.msra.mxu0 0.0
        %205 = vmatprep.subr.mxu0 %v166
        %206 = vmatpush1.msra.mxu0 %v165
        %207 = vmatprep.subr.mxu0 0.0
        %208 = vmatpush2.msra.mxu0 0.0
        %209 = vmatprep.subr.mxu0 0.0
        %210 = vmatpush2.msra.mxu0 0.0
        %211 = vmatprep.subr.mxu0 0.0
        %212 = vmatpush2.msra.mxu0 0.0
        %213 = vmatprep.subr.mxu0 0.0
        %214 = vmatpush2.msra.mxu0 0.0
        %215 = vmatprep.subr.mxu0 0.0
        %216 = vmatpush2.msra.mxu0 0.0
        %217 = vmatprep.subr.mxu0 0.0
        %218 = vmatpush2.msra.mxu0 0.0
        %219 = vmatprep.subr.mxu0 0.0
        %220 = vmatpush2.msra.mxu0 0.0
        %221 = vmatprep.subr.mxu0 0.0
        %222 = vmatpush2.msra.mxu0 0.0
        %223 = vmatprep.subr.mxu0 0.0
        %224 = vmatpush2.msra.mxu0 0.0
        %225 = vmatprep.subr.mxu0 0.0
        %226 = vmatpush2.msra.mxu0 0.0
        %227 = vmatprep.subr.mxu0 0.0
        %228 = vmatpush2.msra.mxu0 0.0
        %229 = vmatprep.subr.mxu0 0.0
        %230 = vmatpush2.msra.mxu0 0.0
        %231 = vmatprep.subr.mxu0 0.0
        %232 = vmatpush2.msra.mxu0 0.0
        %233 = vmatprep.subr.mxu0 0.0
        %234 = vmatpush2.msra.mxu0 0.0
        %235 = vmatprep.subr.mxu0 0.0
        %236 = vmatpush2.msra.mxu0 0.0
        %237 = vmatprep.subr.mxu0 0.0
        %238 = vmatpush2.msra.mxu0 0.0
        %239 = vmatprep.mubr.f32.mxu0 0.0
        %240 = vmatmul.mubr.f32.gmra.mxu0 %v173
        %v241 = vpop.f32.mrf.mxu0
        %v242 = vadd.f32 0.0, %v241
        %v243 = vpop.f32.mrf.mxu0
        %v244 = vadd.f32 0.0, %v243
        %245 = vdwg.mxu0
        %246 = vmatprep.subr.mxu0 0.0
        %247 = vmatpush1.msra.mxu0 0.0
        %248 = vmatprep.subr.mxu0 0.0
        %249 = vmatpush1.msra.mxu0 0.0
        %250 = vmatprep.subr.mxu0 0.0
        %251 = vmatpush1.msra.mxu0 0.0
        %252 = vmatprep.subr.mxu0 0.0
        %253 = vmatpush1.msra.mxu0 0.0
        %254 = vmatprep.subr.mxu0 0.0
        %255 = vmatpush1.msra.mxu0 0.0
        %256 = vmatprep.subr.mxu0 0.0
        %257 = vmatpush1.msra.mxu0 0.0
        %258 = vmatprep.subr.mxu0 0.0
        %259 = vmatpush1.msra.mxu0 0.0
        %260 = vmatprep.subr.mxu0 0.0
        %261 = vmatpush1.msra.mxu0 0.0
        %262 = vmatprep.subr.mxu0 0.0
        %263 = vmatpush1.msra.mxu0 0.0
        %264 = vmatprep.subr.mxu0 0.0
        %265 = vmatpush1.msra.mxu0 0.0
        %266 = vmatprep.subr.mxu0 0.0
        %267 = vmatpush1.msra.mxu0 0.0
        %268 = vmatprep.subr.mxu0 0.0
        %269 = vmatpush1.msra.mxu0 0.0
        %270 = vmatprep.subr.mxu0 0.0
        %271 = vmatpush1.msra.mxu0 0.0
        %272 = vmatprep.subr.mxu0 0.0
        %273 = vmatpush1.msra.mxu0 0.0
        %274 = vmatprep.subr.mxu0 0.0
        %275 = vmatpush1.msra.mxu0 0.0
        %276 = vmatprep.subr.mxu0 %v168
        %277 = vmatpush1.msra.mxu0 %v167
        %278 = vmatprep.subr.mxu0 0.0
        %279 = vmatpush2.msra.mxu0 0.0
        %280 = vmatprep.subr.mxu0 0.0
        %281 = vmatpush2.msra.mxu0 0.0
        %282 = vmatprep.subr.mxu0 0.0
        %283 = vmatpush2.msra.mxu0 0.0
        %284 = vmatprep.subr.mxu0 0.0
        %285 = vmatpush2.msra.mxu0 0.0
        %286 = vmatprep.subr.mxu0 0.0
        %287 = vmatpush2.msra.mxu0 0.0
        %288 = vmatprep.subr.mxu0 0.0
        %289 = vmatpush2.msra.mxu0 0.0
        %290 = vmatprep.subr.mxu0 0.0
        %291 = vmatpush2.msra.mxu0 0.0
        %292 = vmatprep.subr.mxu0 0.0
        %293 = vmatpush2.msra.mxu0 0.0
        %294 = vmatprep.subr.mxu0 0.0
        %295 = vmatpush2.msra.mxu0 0.0
        %296 = vmatprep.subr.mxu0 0.0
        %297 = vmatpush2.msra.mxu0 0.0
        %298 = vmatprep.subr.mxu0 0.0
        %299 = vmatpush2.msra.mxu0 0.0
        %300 = vmatprep.subr.mxu0 0.0
        %301 = vmatpush2.msra.mxu0 0.0
        %302 = vmatprep.subr.mxu0 0.0
        %303 = vmatpush2.msra.mxu0 0.0
        %304 = vmatprep.subr.mxu0 0.0
        %305 = vmatpush2.msra.mxu0 0.0
        %306 = vmatprep.subr.mxu0 0.0
        %307 = vmatpush2.msra.mxu0 0.0
        %308 = vmatprep.subr.mxu0 0.0
        %309 = vmatpush2.msra.mxu0 0.0
        %310 = vmatprep.mubr.f32.mxu0 0.0
        %311 = vmatmul.mubr.f32.gmra.mxu0 %v173
        %v312 = vpop.f32.mrf.mxu0
        %v313 = vadd.f32 0.0, %v312
        %v314 = vpop.f32.mrf.mxu0
        %v315 = vadd.f32 0.0, %v314
        %316 = vdwg.mxu0
        %317 = vmatprep.subr.mxu0 0.0
        %318 = vmatpush1.msra.mxu0 0.0
        %319 = vmatprep.subr.mxu0 0.0
        %320 = vmatpush1.msra.mxu0 0.0
        %321 = vmatprep.subr.mxu0 0.0
        %322 = vmatpush1.msra.mxu0 0.0
        %323 = vmatprep.subr.mxu0 0.0
        %324 = vmatpush1.msra.mxu0 0.0
        %325 = vmatprep.subr.mxu0 0.0
        %326 = vmatpush1.msra.mxu0 0.0
        %327 = vmatprep.subr.mxu0 0.0
        %328 = vmatpush1.msra.mxu0 0.0
        %329 = vmatprep.subr.mxu0 0.0
        %330 = vmatpush1.msra.mxu0 0.0
        %331 = vmatprep.subr.mxu0 0.0
        %332 = vmatpush1.msra.mxu0 0.0
        %333 = vmatprep.subr.mxu0 0.0
        %334 = vmatpush1.msra.mxu0 0.0
        %335 = vmatprep.subr.mxu0 0.0
        %336 = vmatpush1.msra.mxu0 0.0
        %337 = vmatprep.subr.mxu0 0.0
        %338 = vmatpush1.msra.mxu0 0.0
        %339 = vmatprep.subr.mxu0 0.0
        %340 = vmatpush1.msra.mxu0 0.0
        %341 = vmatprep.subr.mxu0 0.0
        %342 = vmatpush1.msra.mxu0 0.0
        %343 = vmatprep.subr.mxu0 0.0
        %344 = vmatpush1.msra.mxu0 0.0
        %345 = vmatprep.subr.mxu0 0.0
        %346 = vmatpush1.msra.mxu0 0.0
        %347 = vmatprep.subr.mxu0 %v170
        %348 = vmatpush1.msra.mxu0 %v169
        %349 = vmatprep.subr.mxu0 0.0
        %350 = vmatpush2.msra.mxu0 0.0
        %351 = vmatprep.subr.mxu0 0.0
        %352 = vmatpush2.msra.mxu0 0.0
        %353 = vmatprep.subr.mxu0 0.0
        %354 = vmatpush2.msra.mxu0 0.0
        %355 = vmatprep.subr.mxu0 0.0
        %356 = vmatpush2.msra.mxu0 0.0
        %357 = vmatprep.subr.mxu0 0.0
        %358 = vmatpush2.msra.mxu0 0.0
        %359 = vmatprep.subr.mxu0 0.0
        %360 = vmatpush2.msra.mxu0 0.0
        %361 = vmatprep.subr.mxu0 0.0
        %362 = vmatpush2.msra.mxu0 0.0
        %363 = vmatprep.subr.mxu0 0.0
        %364 = vmatpush2.msra.mxu0 0.0
        %365 = vmatprep.subr.mxu0 0.0
        %366 = vmatpush2.msra.mxu0 0.0
        %367 = vmatprep.subr.mxu0 0.0
        %368 = vmatpush2.msra.mxu0 0.0
        %369 = vmatprep.subr.mxu0 0.0
        %370 = vmatpush2.msra.mxu0 0.0
        %371 = vmatprep.subr.mxu0 0.0
        %372 = vmatpush2.msra.mxu0 0.0
        %373 = vmatprep.subr.mxu0 0.0
        %374 = vmatpush2.msra.mxu0 0.0
        %375 = vmatprep.subr.mxu0 0.0
        %376 = vmatpush2.msra.mxu0 0.0
        %377 = vmatprep.subr.mxu0 0.0
        %378 = vmatpush2.msra.mxu0 0.0
        %379 = vmatprep.subr.mxu0 0.0
        %380 = vmatpush2.msra.mxu0 0.0
        %381 = vmatprep.mubr.f32.mxu0 0.0
        %382 = vmatmul.mubr.f32.gmra.mxu0 %v173
        %v383 = vpop.f32.mrf.mxu0
        %v384 = vadd.f32 0.0, %v383
        %v385 = vpop.f32.mrf.mxu0
        %v386 = vadd.f32 0.0, %v385
        %387 = vdwg.mxu0
        %v394 = vcombine.low %v242, %v244
        %v395 = vcombine.low %v313, %v315
        %v397 = vunpack.c.l.s4 1983009808
        %v398 = vunpack.c.0.s8 %v397
        %v399 = vlaneseq
        %v400 = vshrl.u32 %v399, 7
        %v401 = vsub.s32 %v398, %v400
        %v402 = vrot.slane %v394, %v401
        %v404 = vunpack.c.l.s4 1983009808
        %v405 = vunpack.c.0.s8 %v404
        %v406 = vlaneseq
        %v407 = vshrl.u32 %v406, 7
        %v408 = vsub.s32 %v405, %v407
        %v409 = vrot.slane %v395, %v408
        %v410 = vcombine.low %v402, %v409
        %v411 = vcombine.low %v384, %v386
        %v413 = vunpack.c.l.s4 1983009808
        %v414 = vunpack.c.0.s8 %v413
        %v415 = vlaneseq
        %v416 = vshrl.u32 %v415, 7
        %v417 = vsub.s32 %v414, %v416
        %v418 = vrot.slane %v411, %v417
        %421 = vst [vmem:[%s162] sm:$0xff] %v410
        %422 = vst [vmem:[%s162 + $0x8] sm:$0xf] %v418
        %s423 = smul.u32 6, %s16
        %p424 = scmp.lt.s32.totalorder %s423, 11
        %s425 = scalar_select %p424, %s423, 11
        %s426 = smul.addr %s425, 2
        %s427 = scalar_lea.vmem %s2, %s426
        // Predicated region
        $region33: #{lut3d_generator_forward.1} parent=27 // pred_check
          %p428 = pneg %p81
        $region34: #{lut3d_generator_forward.1} parent=27 // pred_check_branch
          %430 = sbr.rel (%p428) target = $region36
        $region35: #{lut3d_generator_forward.1} parent=27 // pred_region
          %s431 = smul.u32 6, %s16
        $region36: #{lut3d_generator_forward.1} parent=27 // pred_fallthru
          _
      $region28: #{lut3d_generator_forward.1} parent=5 // pred_fallthru
        _
      %p432 = scmp.le.s32.totalorder 2, %s11
      // Predicated region
      $region37: #{lut3d_generator_forward.1} parent=5 // pred_check
        %p433 = pneg %p432
      $region38: #{lut3d_generator_forward.1} parent=5 // pred_check_branch
        %435 = sbr.rel (%p433) target = $region40
      $region39: #{lut3d_generator_forward.1} parent=5 // pred_region
        %s436 = ssub.s32 %s11, 2
        // Predicated region
        $region41: #{lut3d_generator_forward.1} parent=39 // pred_check
          %p437 = pneg %p87
        $region42: #{lut3d_generator_forward.1} parent=39 // pred_check_branch
          %439 = sbr.rel (%p437) target = $region44
        $region43: #{lut3d_generator_forward.1} parent=39 // pred_region
          %s440 = smul.u32 6, %s17
          %p441 = scmp.lt.s32.totalorder %s440, 11
          %s442 = scalar_select %p441, %s440, 11
          %s443 = smul.addr %s442, 2
          %s444 = scalar_lea.vmem %s2, %s443
        $region44: #{lut3d_generator_forward.1} parent=39 // pred_fallthru
          _
      $region40: #{lut3d_generator_forward.1} parent=5 // pred_fallthru
        _
    $region6: #{lut3d_generator_forward.1} parent=1 // loop_footer
      %s15 = sadd.s32 1, %s11
    $region7: #{lut3d_generator_forward.1} parent=1 // loop_footer_branch
      %10 = sbr.rel target = $region3
    $region8: #{lut3d_generator_forward.1} parent=1 // loop_exit
      _
    %445 = vsyncpa [#allocation3], 1
    %s446 = scalar_lea.sflag [#allocation3], 1
    %447 = vsyncpa %s446, 1

</llo_original>
